<compile_context>
chip_gen: v7x
topology: tpu7x:2x2x1
jax: 0.10.0
libtpu: 0.0.40
codegen_flags: <defaults>
</compile_context>

<pallas_src>
import jax
import jax.numpy as jnp
from jax.experimental import pallas as pl
from jax.experimental.pallas import tpu as pltpu

IN_FEATURES = 3
OUT_FEATURES = 3

# Batches up to this size use a single full-array block with no grid
# (no pipeline / double-buffer overhead).  8192 rows * (512 B in + 512 B out)
# lane-padded = 8 MiB, safely below every chip's default scoped-VMEM limit.
SINGLE_BLOCK_MAX = 8192

# Lane-padded VMEM cost of one row of a (rows, 3) f32 block: 128 lanes * 4 B
# = 512 B per buffer; input + output, double-buffered => 2 KiB per row.
_ROW_VMEM_BYTES = 2 * 2 * 128 * 4


def _vmem_capacity_bytes():
    try:
        return int(pltpu.get_tpu_info().vmem_capacity_bytes)
    except Exception:
        # Conservative fallback = v7x per-TensorCore VMEM (64 MiB); safe on all chips.
        return 64 << 20


_VMEM_CAP = _vmem_capacity_bytes()
# Spend at most ~half of physical VMEM on the double-buffered batch tiles.
_VMEM_BUDGET = _VMEM_CAP // 2
# v6e/v5e (128 MiB): 32768 rows.  v7x / fallback (64 MiB): 16384 rows.
BLOCK_BATCH_MAX = max(1024, (_VMEM_BUDGET // _ROW_VMEM_BYTES) // 8 * 8)
# Raise the scoped-VMEM limit enough for the chosen tile, with headroom.
VMEM_LIMIT_BYTES = min(_VMEM_CAP - (8 << 20), _VMEM_BUDGET + (8 << 20))


def _cdiv(a, b):
    return (a + b - 1) // b


def _round_up(a, m):
    return _cdiv(a, m) * m


def linear_tanh_kernel(x_ref, wt_ref, b_ref, o_ref):
    # x_ref : (rows, 3)  input rows (full array, or one batch tile)
    # wt_ref: (3, 3)     W^T (in_features x out_features), resident in VMEM
    # b_ref : (1, 3)     bias row
    # o_ref : (rows, 3)  output rows
    x = x_ref[...]
    wt = wt_ref[...]
    b = b_ref[...]
    # K=N=3: unrolled VPU multiply-adds instead of an MXU dot (see header).
    y = (x[:, 0:1] * wt[0:1, :]
         + x[:, 1:2] * wt[1:2, :]
         + x[:, 2:3] * wt[2:3, :]
         + b)
    o_ref[...] = jnp.tanh(y)   # EUP


def simple_neural_network(x, weights, bias):
    """x: (batch, 3); weights: (3, 3) (PyTorch out x in layout); bias: (3,).
    Returns tanh(x @ weights.T + bias) as float32, shape (batch, 3)."""
    batch = x.shape[0]
    assert x.shape[1] == IN_FEATURES

    x = x.astype(jnp.float32)
    wt = weights.astype(jnp.float32).T                       # (in, out) = (3, 3)
    b2 = bias.astype(jnp.float32).reshape(1, OUT_FEATURES)   # (1, 3)

    if batch <= SINGLE_BLOCK_MAX:
        # Single full-array block, no grid: no pipeline/double-buffer overhead,
        # no padded temporaries; a full-array block is exempt from the (8,128) rule.
        return pl.pallas_call(
            linear_tanh_kernel,
            out_shape=jax.ShapeDtypeStruct((batch, OUT_FEATURES), jnp.float32),
            in_specs=[
                pl.BlockSpec(memory_space=pltpu.MemorySpace.VMEM),
                pl.BlockSpec(memory_space=pltpu.MemorySpace.VMEM),
                pl.BlockSpec(memory_space=pltpu.MemorySpace.VMEM),
            ],
            out_specs=pl.BlockSpec(memory_space=pltpu.MemorySpace.VMEM),
        )(x, wt, b2)

    # Large batch: row-tiled grid with a ragged last block (no wrapper pad or
    # output slice).  W^T and bias stay resident in VMEM (constant index_map);
    # the batch axis is "parallel" so >=2 grid steps shard across TensorCores.
    block = min(BLOCK_BATCH_MAX, _round_up(_cdiv(batch, 2), 8))
    grid = _cdiv(batch, block)
    return pl.pallas_call(
        linear_tanh_kernel,
        out_shape=jax.ShapeDtypeStruct((batch, OUT_FEATURES), jnp.float32),
        grid=(grid,),
        in_specs=[
            pl.BlockSpec((block, IN_FEATURES), lambda i: (i, 0)),
            pl.BlockSpec((IN_FEATURES, OUT_FEATURES), lambda i: (0, 0)),
            pl.BlockSpec((1, OUT_FEATURES), lambda i: (0, 0)),
        ],
        out_specs=pl.BlockSpec((block, OUT_FEATURES), lambda i: (i, 0)),
        compiler_params=pltpu.CompilerParams(
            dimension_semantics=("parallel",),
            vmem_limit_bytes=VMEM_LIMIT_BYTES,
        ),
    )(x, wt, b2)
    # TODO(synk): if the surrounding graph can supply feature-major (3, batch)
    # activations for free, a lane-dense layout would remove the 3/128-lane
    # padding entirely; kept row-major here to match the PyTorch interface.


if __name__ == "__main__":
    # Deterministic parameters (mirrors the weights/bias passed to __init__).
    weights = jnp.array(
        [[0.1, -0.2, 0.3],
         [0.4, 0.5, -0.6],
         [-0.7, 0.8, 0.9]], dtype=jnp.float32)  # (out_features, in_features)
    bias = jnp.array([0.01, -0.02, 0.03], dtype=jnp.float32)

    key = jax.random.PRNGKey(0)

    # Small-batch (no-grid) path: batch=2, features=3.
    x = jax.random.normal(key, (2, IN_FEATURES), dtype=jnp.float32)
    out = jax.block_until_ready(simple_neural_network(x, weights, bias))
    ref = jnp.tanh(x @ weights.T + bias)
    assert out.shape == (2, OUT_FEATURES)
    assert jnp.allclose(out, ref, atol=1e-5, rtol=1e-5)

    # Tiled large-batch path with a ragged last block (2 grid steps).
    xb = jax.random.normal(key, (2 * SINGLE_BLOCK_MAX + 37, IN_FEATURES),
                           dtype=jnp.float32)
    outb = jax.block_until_ready(simple_neural_network(xb, weights, bias))
    refb = jnp.tanh(xb @ weights.T + bias)
    assert outb.shape == xb.shape
    assert jnp.allclose(outb, refb, atol=1e-5, rtol=1e-5)

    print("KERNEL_OK")
</pallas_src>

<mosaic_0001>
module attributes {stable_mosaic.version = 11 : i64} {
  func.func @linear_tanh_kernel(%arg0: memref<2x3xf32, #tpu.memory_space<vmem>>, %arg1: memref<3x3xf32, #tpu.memory_space<vmem>>, %arg2: memref<1x3xf32, #tpu.memory_space<vmem>>, %arg3: memref<2x3xf32, #tpu.memory_space<vmem>>) attributes {dimension_semantics = [], scalar_prefetch = 0 : i64, scratch_operands = 0 : i64, tpu.core_type = #tpu.core_type<tc>} {
    %c0 = arith.constant 0 : index
    %c0_0 = arith.constant 0 : index
    %0 = vector.load %arg0[%c0, %c0_0] : memref<2x3xf32, #tpu.memory_space<vmem>>, vector<2x3xf32>
    %c0_1 = arith.constant 0 : index
    %c0_2 = arith.constant 0 : index
    %1 = vector.load %arg1[%c0_1, %c0_2] : memref<3x3xf32, #tpu.memory_space<vmem>>, vector<3x3xf32>
    %c0_3 = arith.constant 0 : index
    %c0_4 = arith.constant 0 : index
    %2 = vector.load %arg2[%c0_3, %c0_4] : memref<1x3xf32, #tpu.memory_space<vmem>>, vector<1x3xf32>
    %3 = vector.extract_strided_slice %0 {offsets = [0, 0], sizes = [2, 1], strides = [1, 1]} : vector<2x3xf32> to vector<2x1xf32>
    %4 = vector.extract_strided_slice %1 {offsets = [0, 0], sizes = [1, 3], strides = [1, 1]} : vector<3x3xf32> to vector<1x3xf32>
    %5 = vector.broadcast %3 : vector<2x1xf32> to vector<2x3xf32>
    %6 = vector.broadcast %4 : vector<1x3xf32> to vector<2x3xf32>
    %7 = arith.mulf %5, %6 : vector<2x3xf32>
    %8 = vector.extract_strided_slice %0 {offsets = [0, 1], sizes = [2, 1], strides = [1, 1]} : vector<2x3xf32> to vector<2x1xf32>
    %9 = vector.extract_strided_slice %1 {offsets = [1, 0], sizes = [1, 3], strides = [1, 1]} : vector<3x3xf32> to vector<1x3xf32>
    %10 = vector.broadcast %8 : vector<2x1xf32> to vector<2x3xf32>
    %11 = vector.broadcast %9 : vector<1x3xf32> to vector<2x3xf32>
    %12 = arith.mulf %10, %11 : vector<2x3xf32>
    %13 = arith.addf %7, %12 : vector<2x3xf32>
    %14 = vector.extract_strided_slice %0 {offsets = [0, 2], sizes = [2, 1], strides = [1, 1]} : vector<2x3xf32> to vector<2x1xf32>
    %15 = vector.extract_strided_slice %1 {offsets = [2, 0], sizes = [1, 3], strides = [1, 1]} : vector<3x3xf32> to vector<1x3xf32>
    %16 = vector.broadcast %14 : vector<2x1xf32> to vector<2x3xf32>
    %17 = vector.broadcast %15 : vector<1x3xf32> to vector<2x3xf32>
    %18 = arith.mulf %16, %17 : vector<2x3xf32>
    %19 = arith.addf %13, %18 : vector<2x3xf32>
    %20 = vector.broadcast %2 : vector<1x3xf32> to vector<2x3xf32>
    %21 = arith.addf %19, %20 : vector<2x3xf32>
    %22 = math.tanh %21 : vector<2x3xf32>
    %c0_5 = arith.constant 0 : index
    %c0_6 = arith.constant 0 : index
    %23 = vector.load %arg3[%c0_5, %c0_6] : memref<2x3xf32, #tpu.memory_space<vmem>>, vector<2x3xf32>
    tpu.vector_store %arg3[%c0_5, %c0_6], %22 {strides = array<i32>} : memref<2x3xf32, #tpu.memory_space<vmem>>, vector<2x3xf32>,
    return
  }
}

</mosaic_0001>

<llo_original>
// kernel: tpu_custom_call.1
$region0: #{tpu_custom_call.1}
  #allocation0 [shape = 'u32[]', space=smem, size = 0x4, offset = 0x4, fixed_abs, tag = 'smem constant byte address 0x4 - core index']
  #allocation1 [shape = 'u32[144,128]{1,0:T(1,128)}', space=vmem, size = 0x12000, scoped, tag = 'internal scratch']
  %s0 = inlined_call_operand.hbm [shape: f32[2,3], index: 0, kind: input, shape index: {}]
  %s1 = inlined_call_operand.hbm [shape: f32[3,3], index: 1, kind: input, shape index: {}]
  %s2 = inlined_call_operand.vmem [shape: f32[1,3], index: 2, kind: input, shape index: {}]
  %s3 = inlined_call_operand.hbm [shape: f32[2,3], index: 3, kind: output, shape index: {}]
  %s4 = sld [smem:[#allocation0]]
  $region30: #{tpu_custom_call.1} parent=0
    _
  %s6 = ssub.s32 1, %s4
  %s7 = scalar_select 0, %s6, %s4
  $region1: #{tpu_custom_call.1} parent=0
    #allocation2 [shape = 'u8[1024]{0}', space=vmem, size = 0x400, scoped, tag = 'input window, operand 0, single buffered']
    #allocation3 [shape = 's32[1]{0}', space=sflag, size = 0x4, scoped, tag = 'scoped memory for tpu_custom_call.1']
    #allocation4 [shape = 's32[1]{0}', space=sflag, size = 0x4, scoped, tag = 'scoped memory for tpu_custom_call.1']
    #allocation5 [shape = 'u8[2048]{0}', space=vmem, size = 0x800, scoped, tag = 'input window, operand 1, single buffered']
    #allocation6 [shape = 's32[1]{0}', space=sflag, size = 0x4, scoped, tag = 'scoped memory for tpu_custom_call.1']
    #allocation7 [shape = 'u8[1024]{0}', space=vmem, size = 0x400, scoped, tag = 'output window, operand 0, single buffered']
    %8 = vsyncpa [#allocation3], 0
    %9 = vsyncpa [#allocation6], 0
    %10 = vsyncpa [#allocation4], 0
    // Predicated region
    $region2: #{tpu_custom_call.1} parent=1 // pred_check
      _
    $region3: #{tpu_custom_call.1} parent=1 // pred_check_branch
      %12 = sbr.rel (0) target = $region5
    $region4: #{tpu_custom_call.1} parent=1 // pred_region
      %s14 = ssub.s32 32, 32
      %15 = vsyncadd [#allocation3], %s14
      %s17 = sshll.u32 [#allocation2], 4
      %s18 = int_to_ptr.vmem [resolvable:$true] %s17
      %20 = dma.hbm_to_vmem [thread:$0]  %s0, 32, %s18, [#allocation3]
    $region5: #{tpu_custom_call.1} parent=1 // pred_fallthru
      _
    // Predicated region
    $region6: #{tpu_custom_call.1} parent=1 // pred_check
      _
    $region7: #{tpu_custom_call.1} parent=1 // pred_check_branch
      %22 = sbr.rel (0) target = $region9
    $region8: #{tpu_custom_call.1} parent=1 // pred_region
      %s24 = ssub.s32 64, 64
      %25 = vsyncadd [#allocation6], %s24
      %s27 = sshll.u32 [#allocation5], 4
      %s28 = int_to_ptr.vmem [resolvable:$true] %s27
      %30 = dma.hbm_to_vmem [thread:$0]  %s1, 64, %s28, [#allocation6]
    $region9: #{tpu_custom_call.1} parent=1 // pred_fallthru
      _
    // Predicated region
    $region10: #{tpu_custom_call.1} parent=1 // pred_check
      _
    $region11: #{tpu_custom_call.1} parent=1 // pred_check_branch
      %32 = sbr.rel (0) target = $region13
    $region12: #{tpu_custom_call.1} parent=1 // pred_region
      _
    $region13: #{tpu_custom_call.1} parent=1 // pred_fallthru
      _
    // Predicated region
    $region14: #{tpu_custom_call.1} parent=1 // pred_check
      _
    $region15: #{tpu_custom_call.1} parent=1 // pred_check_branch
      %34 = sbr.rel (0) target = $region17
    $region16: #{tpu_custom_call.1} parent=1 // pred_region
      %35 = dma.done [#allocation3], 32
    $region17: #{tpu_custom_call.1} parent=1 // pred_fallthru
      _
    // Predicated region
    $region18: #{tpu_custom_call.1} parent=1 // pred_check
      _
    $region19: #{tpu_custom_call.1} parent=1 // pred_check_branch
      %37 = sbr.rel (0) target = $region21
    $region20: #{tpu_custom_call.1} parent=1 // pred_region
      %38 = dma.done [#allocation6], 64
    $region21: #{tpu_custom_call.1} parent=1 // pred_fallthru
      _
    %v39 = vld [vmem:[#allocation2] sm:$0x3]
    %v40 = vld [vmem:[#allocation5] sm:$0x7]
    %v41 = vld [vmem:[%s2] sm:$0x1]
    %43 = vset.pattern.permute.xlu0 0
    %44 = vperm.xlu0 %43, %v39
    %v45 = vpop.permute.xlu0 %44
    %v47 = vlaneseq
    %v48 = vshrl.u32 %v47, 7
    %v49 = vsub.s32 0, %v48
    %v50 = vrot.slane %v40, %v49
    %v51 = vmul.f32 %v45, %v50
    %52 = vset.pattern.permute.xlu0 1
    %53 = vperm.xlu0 %52, %v39
    %v54 = vpop.permute.xlu0 %53
    %v56 = vlaneseq
    %v57 = vshrl.u32 %v56, 7
    %v58 = vsub.s32 1, %v57
    %v59 = vrot.slane %v40, %v58
    %v60 = vmul.f32 %v54, %v59
    %v61 = vadd.f32 %v51, %v60
    %62 = vset.pattern.permute.xlu0 2
    %63 = vperm.xlu0 %62, %v39
    %v64 = vpop.permute.xlu0 %63
    %v66 = vlaneseq
    %v67 = vshrl.u32 %v66, 7
    %v68 = vsub.s32 2, %v67
    %v69 = vrot.slane %v40, %v68
    %v70 = vmul.f32 %v64, %v69
    %v71 = vadd.f32 %v61, %v70
    %v73 = vlaneseq
    %v74 = vshrl.u32 %v73, 7
    %v75 = vsub.s32 0, %v74
    %v76 = vrot.slane %v41, %v75
    %v78 = vadd.f32 %v71, %v76
    %v79 = vtanh.pop %v78
    %vm80 = vcmask 17408
    %81 = vst.msk [vmem:[#allocation7] sm:$0x3] %vm80, %v79
    // Predicated region
    $region22: #{tpu_custom_call.1} parent=1 // pred_check
      _
    $region23: #{tpu_custom_call.1} parent=1 // pred_check_branch
      %83 = sbr.rel (0) target = $region25
    $region24: #{tpu_custom_call.1} parent=1 // pred_region
      %s85 = ssub.s32 32, 32
      %86 = vsyncadd [#allocation4], %s85
      %s88 = sshll.u32 [#allocation7], 4
      %s89 = int_to_ptr.vmem [resolvable:$true] %s88
      %91 = dma.vmem_to_hbm [thread:$0]  %s89, 32, %s3, [#allocation4]
    $region25: #{tpu_custom_call.1} parent=1 // pred_fallthru
      _
    // Predicated region
    $region26: #{tpu_custom_call.1} parent=1 // pred_check
      _
    $region27: #{tpu_custom_call.1} parent=1 // pred_check_branch
      %93 = sbr.rel (0) target = $region29
    $region28: #{tpu_custom_call.1} parent=1 // pred_region
      %94 = dma.done [#allocation4], 32
    $region29: #{tpu_custom_call.1} parent=1 // pred_fallthru
      _
    %95 = vsyncpa [#allocation3], 1
    %96 = vsyncpa [#allocation6], 1
    %97 = vsyncpa [#allocation4], 1

</llo_original>
